<compile_context>
chip_gen: v7x
topology: tpu7x:2x2x1
jax: 0.10.0
libtpu: 0.0.40
codegen_flags: <defaults>
</compile_context>

<pallas_src>
import math

import jax
import jax.numpy as jnp
from jax.experimental import pallas as pl
from jax.experimental.pallas import tpu as pltpu

INPUT_DIM = 2
HIDDEN_DIMS = (32, 16, 8)
OUTPUT_DIM = 1
WEIGHT_REG = 1e-06
DROPOUT_REG = 1e-05
TEMPERATURE = 0.1          # 1/T == 10 exactly -> polynomial gate
DROPOUT_INIT = 0.1
EPS = 1e-07

MAX_TB = 2048              # batch-tile cap (lanes); VMEM use stays tiny


def _round_up(a, b):
    return (a + b - 1) // b * b


def concrete_dropout_nn_kernel(c_ref, x_ref, u1_ref, u2_ref, u3_ref,
                               w1_ref, b1_ref, w2_ref, b2_ref,
                               w3_ref, b3_ref, wo_ref, bo_ref,
                               out_ref):
    """One batch tile; activations are (features, TB) with batch on lanes.

    c_ref (SMEM, (3,) f32): per hidden layer, C = ((p+eps)/(1-p+eps))^(1/T).
    Weights w*_ref already carry the 1/(1-p) factor (folded in the wrapper).
    Gate identity (exact algebra of the torch reference, 1/T = 10):
        gate = 1 - sigmoid(z) = b^10 / (b^10 + C * a^10),
        a = u+eps, b = 1-u+eps.
    """
    h = x_ref[...]                                          # (in_features, TB)

    layers = ((u1_ref, w1_ref, b1_ref),
              (u2_ref, w2_ref, b2_ref),
              (u3_ref, w3_ref, b3_ref))
    for i, (u_ref, w_ref, b_ref) in enumerate(layers):
        c = c_ref[i]                                        # SMEM scalar

        # Concrete dropout gate: pure VPU multiplies + one divide.
        u = jnp.clip(u_ref[...], 1e-3, 1.0 - 1e-3)          # keep x^10 in f32 range
        a = u + EPS
        b = 1.0 - u + EPS
        a2 = a * a; a4 = a2 * a2; a8 = a4 * a4; a10 = a8 * a2
        b2 = b * b; b4 = b2 * b2; b8 = b4 * b4; b10 = b8 * b2
        gate = b10 / (b10 + c * a10)                        # == sigmoid(-z)
        h = h * gate                                        # 1/(1-p) is in W

        # Linear (W @ h + b) on the MXU, then ReLU.
        h = jnp.dot(w_ref[...], h, preferred_element_type=jnp.float32) + b_ref[...]
        h = jnp.maximum(h, 0.0)

    # Output layer + sigmoid; (1, TB) lane-dense store.
    logits_out = jnp.dot(wo_ref[...], h, preferred_element_type=jnp.float32) + bo_ref[...]
    out_ref[...] = jax.nn.sigmoid(logits_out)


def _regularization(logits, weights_biases, batch):
    """Matches torch: weight_reg*sum(W^2)/(1-p) + dropout_reg*x.numel()*H(p).

    Data-independent (weights, logit_p, static shapes only) -> wrapper-side.
    x.numel() in the reference includes the batch dimension; the weight
    penalty covers only W (not the bias), as in the torch module.
    """
    in_dims = (INPUT_DIM,) + HIDDEN_DIMS[:-1]
    reg = jnp.float32(0.0)
    for i in range(len(HIDDEN_DIMS)):
        w, _ = weights_biases[i]
        p = jax.nn.sigmoid(logits[i])
        wreg = WEIGHT_REG * jnp.sum(w * w) / (1.0 - p)
        ent = p * jnp.log(p + EPS) + (1.0 - p) * jnp.log(1.0 - p + EPS)
        dreg = DROPOUT_REG * float(batch * in_dims[i]) * ent
        reg = reg + wreg + dreg
    return reg


def _pick_tile(batch):
    """Batch tile (lanes). Big tiles amortize grid overhead; for very large
    batches keep >= 2 tiles so the parallel axis can shard across v7x's 2 TCs."""
    pb = _round_up(batch, 128)
    if pb <= MAX_TB:
        return pb, pb
    n_tiles = max(2, -(-pb // MAX_TB))
    tb = _round_up(-(-pb // n_tiles), 128)
    return tb, _round_up(batch, tb)


def concrete_dropout_nn_forward(x, key, logits, weights_biases):
    """Full forward pass; returns (out[batch, 1], regularization_loss)."""
    batch = x.shape[0]
    (w1, b1), (w2, b2), (w3, b3), (wo, bo) = weights_biases

    # Per-layer dropout constants (data-independent): C and 1/(1-p).
    p = jax.nn.sigmoid(logits)                                        # (3,)
    c_vals = (((p + EPS) / (1.0 - p + EPS)) ** 10).astype(jnp.float32)  # (3,) SMEM
    inv_1mp = 1.0 / (1.0 - p)
    w1s = (w1 * inv_1mp[0]).astype(jnp.float32)   # fold 1/(1-p) into weights
    w2s = (w2 * inv_1mp[1]).astype(jnp.float32)
    w3s = (w3 * inv_1mp[2]).astype(jnp.float32)

    tb, padded_batch = _pick_tile(batch)

    # Batch on lanes: x -> (features, padded_batch), zero-padded.
    x_t = jnp.pad(x.astype(jnp.float32).T, ((0, 0), (0, padded_batch - batch)))

    # Dropout uniforms (features, batch) per CD layer, drawn host/XLA-side.
    # TODO(synk): torch.rand_like's RNG stream is replaced by jax.random
    # (same uniform distribution, different deterministic stream).
    ku1, ku2, ku3 = jax.random.split(key, 3)
    u1 = jax.random.uniform(ku1, (INPUT_DIM, padded_batch), jnp.float32)
    u2 = jax.random.uniform(ku2, (HIDDEN_DIMS[0], padded_batch), jnp.float32)
    u3 = jax.random.uniform(ku3, (HIDDEN_DIMS[1], padded_batch), jnp.float32)

    smem = pl.BlockSpec(memory_space=pltpu.MemorySpace.SMEM)

    out_padded = pl.pallas_call(
        concrete_dropout_nn_kernel,
        out_shape=jax.ShapeDtypeStruct((OUTPUT_DIM, padded_batch), jnp.float32),
        grid=(padded_batch // tb,),
        in_specs=[
            smem,                                                    # c_vals (3,)
            pl.BlockSpec((INPUT_DIM, tb), lambda i: (0, i)),         # x tile
            pl.BlockSpec((INPUT_DIM, tb), lambda i: (0, i)),         # u1 tile
            pl.BlockSpec((HIDDEN_DIMS[0], tb), lambda i: (0, i)),    # u2 tile
            pl.BlockSpec((HIDDEN_DIMS[1], tb), lambda i: (0, i)),    # u3 tile
            pl.BlockSpec((HIDDEN_DIMS[0], INPUT_DIM), lambda i: (0, 0)),
            pl.BlockSpec((HIDDEN_DIMS[0], 1), lambda i: (0, 0)),
            pl.BlockSpec((HIDDEN_DIMS[1], HIDDEN_DIMS[0]), lambda i: (0, 0)),
            pl.BlockSpec((HIDDEN_DIMS[1], 1), lambda i: (0, 0)),
            pl.BlockSpec((HIDDEN_DIMS[2], HIDDEN_DIMS[1]), lambda i: (0, 0)),
            pl.BlockSpec((HIDDEN_DIMS[2], 1), lambda i: (0, 0)),
            pl.BlockSpec((OUTPUT_DIM, HIDDEN_DIMS[2]), lambda i: (0, 0)),
            pl.BlockSpec((OUTPUT_DIM, 1), lambda i: (0, 0)),
        ],
        out_specs=pl.BlockSpec((OUTPUT_DIM, tb), lambda i: (0, i)),
        compiler_params=pltpu.CompilerParams(dimension_semantics=("parallel",)),
    )(c_vals, x_t, u1, u2, u3, w1s, b1, w2s, b2, w3s, b3, wo, bo)

    out = out_padded[:, :batch].T                                    # (batch, 1)
    reg = _regularization(logits, weights_biases, batch)
    return out, reg


def init_params(key):
    """torch.nn.Linear-style init; weights stored as (out_features, in_features)."""
    dims = [INPUT_DIM] + list(HIDDEN_DIMS) + [OUTPUT_DIM]
    keys = jax.random.split(key, 2 * (len(dims) - 1))
    weights_biases = []
    k = 0
    for fan_in, fan_out in zip(dims[:-1], dims[1:]):
        bound = 1.0 / math.sqrt(fan_in)
        w = jax.random.uniform(keys[k], (fan_out, fan_in), jnp.float32, -bound, bound)
        k += 1
        b = jax.random.uniform(keys[k], (fan_out, 1), jnp.float32, -bound, bound)
        k += 1
        weights_biases.append((w, b))

    # init_min == init_max == 0.1 -> logit_p is deterministic.
    logit = math.log(DROPOUT_INIT) - math.log(1.0 - DROPOUT_INIT)
    logits = jnp.full((len(HIDDEN_DIMS),), logit, dtype=jnp.float32)
    return logits, weights_biases


if __name__ == "__main__":
    key = jax.random.PRNGKey(0)
    k_param, k_x, k_drop = jax.random.split(key, 3)

    logits, weights_biases = init_params(k_param)

    batch = 8
    x = jax.random.normal(k_x, (batch, INPUT_DIM), dtype=jnp.float32)

    forward = jax.jit(concrete_dropout_nn_forward)
    out, reg_loss = forward(x, k_drop, logits, weights_biases)
    jax.block_until_ready((out, reg_loss))

    assert out.shape == (batch, OUTPUT_DIM)
    assert bool(jnp.all((out >= 0.0) & (out <= 1.0)))
    assert bool(jnp.isfinite(reg_loss))
    print("KERNEL_OK")
</pallas_src>

<mosaic_0001>
module attributes {stable_mosaic.version = 11 : i64} {
  func.func @concrete_dropout_nn_kernel(%arg0: i32, %arg1: memref<3xf32, #tpu.memory_space<smem>>, %arg2: memref<2x128xf32, #tpu.memory_space<vmem>>, %arg3: memref<2x128xf32, #tpu.memory_space<vmem>>, %arg4: memref<32x128xf32, #tpu.memory_space<vmem>>, %arg5: memref<16x128xf32, #tpu.memory_space<vmem>>, %arg6: memref<32x2xf32, #tpu.memory_space<vmem>>, %arg7: memref<32x1xf32, #tpu.memory_space<vmem>>, %arg8: memref<16x32xf32, #tpu.memory_space<vmem>>, %arg9: memref<16x1xf32, #tpu.memory_space<vmem>>, %arg10: memref<8x16xf32, #tpu.memory_space<vmem>>, %arg11: memref<8x1xf32, #tpu.memory_space<vmem>>, %arg12: memref<1x8xf32, #tpu.memory_space<vmem>>, %arg13: memref<1x1xf32, #tpu.memory_space<vmem>>, %arg14: memref<1x128xf32, #tpu.memory_space<vmem>>) attributes {dimension_semantics = [#tpu.dimension_semantics<parallel>], iteration_bounds = array<i64: 1>, scalar_prefetch = 0 : i64, scratch_operands = 0 : i64, tpu.core_type = #tpu.core_type<tc>, window_params = [{transform_indices = @transform_0, window_bounds = array<i64: 3>}, {transform_indices = @transform_1, window_bounds = array<i64: 2, 128>}, {transform_indices = @transform_2, window_bounds = array<i64: 2, 128>}, {transform_indices = @transform_3, window_bounds = array<i64: 32, 128>}, {transform_indices = @transform_4, window_bounds = array<i64: 16, 128>}, {pipeline_mode = #tpu.pipeline_mode<synchronous>, transform_indices = @transform_5, window_bounds = array<i64: 32, 2>}, {pipeline_mode = #tpu.pipeline_mode<synchronous>, transform_indices = @transform_6, window_bounds = array<i64: 32, 1>}, {pipeline_mode = #tpu.pipeline_mode<synchronous>, transform_indices = @transform_7, window_bounds = array<i64: 16, 32>}, {pipeline_mode = #tpu.pipeline_mode<synchronous>, transform_indices = @transform_8, window_bounds = array<i64: 16, 1>}, {pipeline_mode = #tpu.pipeline_mode<synchronous>, transform_indices = @transform_9, window_bounds = array<i64: 8, 16>}, {pipeline_mode = #tpu.pipeline_mode<synchronous>, transform_indices = @transform_10, window_bounds = array<i64: 8, 1>}, {pipeline_mode = #tpu.pipeline_mode<synchronous>, transform_indices = @transform_11, window_bounds = array<i64: 1, 8>}, {pipeline_mode = #tpu.pipeline_mode<synchronous>, transform_indices = @transform_12, window_bounds = array<i64: 1, 1>}, {transform_indices = @transform_13, window_bounds = array<i64: 1, 128>}]} {
    %c0 = arith.constant 0 : index
    %c0_0 = arith.constant 0 : index
    %0 = vector.load %arg2[%c0, %c0_0] : memref<2x128xf32, #tpu.memory_space<vmem>>, vector<2x128xf32>
    %c0_1 = arith.constant 0 : index
    %1 = memref.load %arg1[%c0_1] : memref<3xf32, #tpu.memory_space<smem>>
    %c0_2 = arith.constant 0 : index
    %c0_3 = arith.constant 0 : index
    %2 = vector.load %arg3[%c0_2, %c0_3] : memref<2x128xf32, #tpu.memory_space<vmem>>, vector<2x128xf32>
    %cst = arith.constant 1.000000e-03 : f32
    %cst_4 = arith.constant 9.990000e-01 : f32
    %3 = vector.broadcast %cst : f32 to vector<2x128xf32>
    %4 = arith.maximumf %3, %2 : vector<2x128xf32>
    %5 = vector.broadcast %cst_4 : f32 to vector<2x128xf32>
    %6 = arith.minimumf %5, %4 : vector<2x128xf32>
    %cst_5 = arith.constant 1.000000e-07 : f32
    %7 = vector.broadcast %cst_5 : f32 to vector<2x128xf32>
    %8 = arith.addf %6, %7 : vector<2x128xf32>
    %cst_6 = arith.constant 1.000000e+00 : f32
    %9 = vector.broadcast %cst_6 : f32 to vector<2x128xf32>
    %10 = arith.subf %9, %6 : vector<2x128xf32>
    %cst_7 = arith.constant 1.000000e-07 : f32
    %11 = vector.broadcast %cst_7 : f32 to vector<2x128xf32>
    %12 = arith.addf %10, %11 : vector<2x128xf32>
    %13 = arith.mulf %8, %8 : vector<2x128xf32>
    %14 = arith.mulf %13, %13 : vector<2x128xf32>
    %15 = arith.mulf %14, %14 : vector<2x128xf32>
    %16 = arith.mulf %15, %13 : vector<2x128xf32>
    %17 = arith.mulf %12, %12 : vector<2x128xf32>
    %18 = arith.mulf %17, %17 : vector<2x128xf32>
    %19 = arith.mulf %18, %18 : vector<2x128xf32>
    %20 = arith.mulf %19, %17 : vector<2x128xf32>
    %21 = vector.broadcast %1 : f32 to vector<2x128xf32>
    %22 = arith.mulf %21, %16 : vector<2x128xf32>
    %23 = arith.addf %20, %22 : vector<2x128xf32>
    %24 = arith.divf %20, %23 : vector<2x128xf32>
    %25 = arith.mulf %0, %24 : vector<2x128xf32>
    %c0_8 = arith.constant 0 : index
    %c0_9 = arith.constant 0 : index
    %26 = vector.load %arg6[%c0_8, %c0_9] : memref<32x2xf32, #tpu.memory_space<vmem>>, vector<32x2xf32>
    %cst_10 = arith.constant dense<0.000000e+00> : vector<32x128xf32>
    %27 = tpu.matmul %26, %25, %cst_10 {dimension_numbers = #tpu.dot_dimension_numbers<[1], [0], [0], [1], [0, 0, 1, 1], [], []>} : vector<32x2xf32>, vector<2x128xf32>, vector<32x128xf32> -> vector<32x128xf32>
    %c0_11 = arith.constant 0 : index
    %c0_12 = arith.constant 0 : index
    %28 = vector.load %arg7[%c0_11, %c0_12] : memref<32x1xf32, #tpu.memory_space<vmem>>, vector<32x1xf32>
    %29 = vector.broadcast %28 : vector<32x1xf32> to vector<32x128xf32>
    %30 = arith.addf %27, %29 : vector<32x128xf32>
    %cst_13 = arith.constant 0.000000e+00 : f32
    %31 = vector.broadcast %cst_13 : f32 to vector<32x128xf32>
    %32 = arith.maximumf %30, %31 : vector<32x128xf32>
    %c1 = arith.constant 1 : index
    %33 = memref.load %arg1[%c1] : memref<3xf32, #tpu.memory_space<smem>>
    %c0_14 = arith.constant 0 : index
    %c0_15 = arith.constant 0 : index
    %34 = vector.load %arg4[%c0_14, %c0_15] : memref<32x128xf32, #tpu.memory_space<vmem>>, vector<32x128xf32>
    %cst_16 = arith.constant 1.000000e-03 : f32
    %cst_17 = arith.constant 9.990000e-01 : f32
    %35 = vector.broadcast %cst_16 : f32 to vector<32x128xf32>
    %36 = arith.maximumf %35, %34 : vector<32x128xf32>
    %37 = vector.broadcast %cst_17 : f32 to vector<32x128xf32>
    %38 = arith.minimumf %37, %36 : vector<32x128xf32>
    %cst_18 = arith.constant 1.000000e-07 : f32
    %39 = vector.broadcast %cst_18 : f32 to vector<32x128xf32>
    %40 = arith.addf %38, %39 : vector<32x128xf32>
    %cst_19 = arith.constant 1.000000e+00 : f32
    %41 = vector.broadcast %cst_19 : f32 to vector<32x128xf32>
    %42 = arith.subf %41, %38 : vector<32x128xf32>
    %cst_20 = arith.constant 1.000000e-07 : f32
    %43 = vector.broadcast %cst_20 : f32 to vector<32x128xf32>
    %44 = arith.addf %42, %43 : vector<32x128xf32>
    %45 = arith.mulf %40, %40 : vector<32x128xf32>
    %46 = arith.mulf %45, %45 : vector<32x128xf32>
    %47 = arith.mulf %46, %46 : vector<32x128xf32>
    %48 = arith.mulf %47, %45 : vector<32x128xf32>
    %49 = arith.mulf %44, %44 : vector<32x128xf32>
    %50 = arith.mulf %49, %49 : vector<32x128xf32>
    %51 = arith.mulf %50, %50 : vector<32x128xf32>
    %52 = arith.mulf %51, %49 : vector<32x128xf32>
    %53 = vector.broadcast %33 : f32 to vector<32x128xf32>
    %54 = arith.mulf %53, %48 : vector<32x128xf32>
    %55 = arith.addf %52, %54 : vector<32x128xf32>
    %56 = arith.divf %52, %55 : vector<32x128xf32>
    %57 = arith.mulf %32, %56 : vector<32x128xf32>
    %c0_21 = arith.constant 0 : index
    %c0_22 = arith.constant 0 : index
    %58 = vector.load %arg8[%c0_21, %c0_22] : memref<16x32xf32, #tpu.memory_space<vmem>>, vector<16x32xf32>
    %cst_23 = arith.constant dense<0.000000e+00> : vector<16x128xf32>
    %59 = tpu.matmul %58, %57, %cst_23 {dimension_numbers = #tpu.dot_dimension_numbers<[1], [0], [0], [1], [0, 0, 1, 1], [], []>} : vector<16x32xf32>, vector<32x128xf32>, vector<16x128xf32> -> vector<16x128xf32>
    %c0_24 = arith.constant 0 : index
    %c0_25 = arith.constant 0 : index
    %60 = vector.load %arg9[%c0_24, %c0_25] : memref<16x1xf32, #tpu.memory_space<vmem>>, vector<16x1xf32>
    %61 = vector.broadcast %60 : vector<16x1xf32> to vector<16x128xf32>
    %62 = arith.addf %59, %61 : vector<16x128xf32>
    %cst_26 = arith.constant 0.000000e+00 : f32
    %63 = vector.broadcast %cst_26 : f32 to vector<16x128xf32>
    %64 = arith.maximumf %62, %63 : vector<16x128xf32>
    %c2 = arith.constant 2 : index
    %65 = memref.load %arg1[%c2] : memref<3xf32, #tpu.memory_space<smem>>
    %c0_27 = arith.constant 0 : index
    %c0_28 = arith.constant 0 : index
    %66 = vector.load %arg5[%c0_27, %c0_28] : memref<16x128xf32, #tpu.memory_space<vmem>>, vector<16x128xf32>
    %cst_29 = arith.constant 1.000000e-03 : f32
    %cst_30 = arith.constant 9.990000e-01 : f32
    %67 = vector.broadcast %cst_29 : f32 to vector<16x128xf32>
    %68 = arith.maximumf %67, %66 : vector<16x128xf32>
    %69 = vector.broadcast %cst_30 : f32 to vector<16x128xf32>
    %70 = arith.minimumf %69, %68 : vector<16x128xf32>
    %cst_31 = arith.constant 1.000000e-07 : f32
    %71 = vector.broadcast %cst_31 : f32 to vector<16x128xf32>
    %72 = arith.addf %70, %71 : vector<16x128xf32>
    %cst_32 = arith.constant 1.000000e+00 : f32
    %73 = vector.broadcast %cst_32 : f32 to vector<16x128xf32>
    %74 = arith.subf %73, %70 : vector<16x128xf32>
    %cst_33 = arith.constant 1.000000e-07 : f32
    %75 = vector.broadcast %cst_33 : f32 to vector<16x128xf32>
    %76 = arith.addf %74, %75 : vector<16x128xf32>
    %77 = arith.mulf %72, %72 : vector<16x128xf32>
    %78 = arith.mulf %77, %77 : vector<16x128xf32>
    %79 = arith.mulf %78, %78 : vector<16x128xf32>
    %80 = arith.mulf %79, %77 : vector<16x128xf32>
    %81 = arith.mulf %76, %76 : vector<16x128xf32>
    %82 = arith.mulf %81, %81 : vector<16x128xf32>
    %83 = arith.mulf %82, %82 : vector<16x128xf32>
    %84 = arith.mulf %83, %81 : vector<16x128xf32>
    %85 = vector.broadcast %65 : f32 to vector<16x128xf32>
    %86 = arith.mulf %85, %80 : vector<16x128xf32>
    %87 = arith.addf %84, %86 : vector<16x128xf32>
    %88 = arith.divf %84, %87 : vector<16x128xf32>
    %89 = arith.mulf %64, %88 : vector<16x128xf32>
    %c0_34 = arith.constant 0 : index
    %c0_35 = arith.constant 0 : index
    %90 = vector.load %arg10[%c0_34, %c0_35] : memref<8x16xf32, #tpu.memory_space<vmem>>, vector<8x16xf32>
    %cst_36 = arith.constant dense<0.000000e+00> : vector<8x128xf32>
    %91 = tpu.matmul %90, %89, %cst_36 {dimension_numbers = #tpu.dot_dimension_numbers<[1], [0], [0], [1], [0, 0, 1, 1], [], []>} : vector<8x16xf32>, vector<16x128xf32>, vector<8x128xf32> -> vector<8x128xf32>
    %c0_37 = arith.constant 0 : index
    %c0_38 = arith.constant 0 : index
    %92 = vector.load %arg11[%c0_37, %c0_38] : memref<8x1xf32, #tpu.memory_space<vmem>>, vector<8x1xf32>
    %93 = vector.broadcast %92 : vector<8x1xf32> to vector<8x128xf32>
    %94 = arith.addf %91, %93 : vector<8x128xf32>
    %cst_39 = arith.constant 0.000000e+00 : f32
    %95 = vector.broadcast %cst_39 : f32 to vector<8x128xf32>
    %96 = arith.maximumf %94, %95 : vector<8x128xf32>
    %c0_40 = arith.constant 0 : index
    %c0_41 = arith.constant 0 : index
    %97 = vector.load %arg12[%c0_40, %c0_41] : memref<1x8xf32, #tpu.memory_space<vmem>>, vector<1x8xf32>
    %cst_42 = arith.constant dense<0.000000e+00> : vector<1x128xf32>
    %98 = tpu.matmul %97, %96, %cst_42 {dimension_numbers = #tpu.dot_dimension_numbers<[1], [0], [0], [1], [0, 0, 1, 1], [], []>} : vector<1x8xf32>, vector<8x128xf32>, vector<1x128xf32> -> vector<1x128xf32>
    %c0_43 = arith.constant 0 : index
    %c0_44 = arith.constant 0 : index
    %99 = vector.load %arg13[%c0_43, %c0_44] : memref<1x1xf32, #tpu.memory_space<vmem>>, vector<1x1xf32>
    %100 = vector.broadcast %99 : vector<1x1xf32> to vector<1x128xf32>
    %101 = arith.addf %98, %100 : vector<1x128xf32>
    %102 = arith.negf %101 : vector<1x128xf32>
    %103 = math.exp %102 : vector<1x128xf32>
    %cst_45 = arith.constant 1.000000e+00 : f32
    %104 = vector.broadcast %cst_45 : f32 to vector<1x128xf32>
    %105 = arith.addf %104, %103 : vector<1x128xf32>
    %106 = arith.divf %104, %105 : vector<1x128xf32>
    %c0_46 = arith.constant 0 : index
    %c0_47 = arith.constant 0 : index
    %107 = vector.load %arg14[%c0_46, %c0_47] : memref<1x128xf32, #tpu.memory_space<vmem>>, vector<1x128xf32>
    tpu.vector_store %arg14[%c0_46, %c0_47], %106 {strides = array<i32>} : memref<1x128xf32, #tpu.memory_space<vmem>>, vector<1x128xf32>,
    return
  }
  func.func @transform_0(%arg0: i32) -> i32 {
    %c0_i32 = arith.constant 0 : i32
    %c0_i32_0 = arith.constant 0 : i32
    return %c0_i32 : i32
  }
  func.func @transform_1(%arg0: i32) -> (i32, i32) {
    %c0_i32 = arith.constant 0 : i32
    %c0_i32_0 = arith.constant 0 : i32
    return %c0_i32, %arg0 : i32, i32
  }
  func.func @transform_2(%arg0: i32) -> (i32, i32) {
    %c0_i32 = arith.constant 0 : i32
    %c0_i32_0 = arith.constant 0 : i32
    return %c0_i32, %arg0 : i32, i32
  }
  func.func @transform_3(%arg0: i32) -> (i32, i32) {
    %c0_i32 = arith.constant 0 : i32
    %c0_i32_0 = arith.constant 0 : i32
    return %c0_i32, %arg0 : i32, i32
  }
  func.func @transform_4(%arg0: i32) -> (i32, i32) {
    %c0_i32 = arith.constant 0 : i32
    %c0_i32_0 = arith.constant 0 : i32
    return %c0_i32, %arg0 : i32, i32
  }
  func.func @transform_5(%arg0: i32) -> (i32, i32) {
    %c0_i32 = arith.constant 0 : i32
    %c0_i32_0 = arith.constant 0 : i32
    %c0_i32_1 = arith.constant 0 : i32
    return %c0_i32, %c0_i32_0 : i32, i32
  }
  func.func @transform_6(%arg0: i32) -> (i32, i32) {
    %c0_i32 = arith.constant 0 : i32
    %c0_i32_0 = arith.constant 0 : i32
    %c0_i32_1 = arith.constant 0 : i32
    return %c0_i32, %c0_i32_0 : i32, i32
  }
  func.func @transform_7(%arg0: i32) -> (i32, i32) {
    %c0_i32 = arith.constant 0 : i32
    %c0_i32_0 = arith.constant 0 : i32
    %c0_i32_1 = arith.constant 0 : i32
    return %c0_i32, %c0_i32_0 : i32, i32
  }
  func.func @transform_8(%arg0: i32) -> (i32, i32) {
    %c0_i32 = arith.constant 0 : i32
    %c0_i32_0 = arith.constant 0 : i32
    %c0_i32_1 = arith.constant 0 : i32
    return %c0_i32, %c0_i32_0 : i32, i32
  }
  func.func @transform_9(%arg0: i32) -> (i32, i32) {
    %c0_i32 = arith.constant 0 : i32
    %c0_i32_0 = arith.constant 0 : i32
    %c0_i32_1 = arith.constant 0 : i32
    return %c0_i32, %c0_i32_0 : i32, i32
  }
  func.func @transform_10(%arg0: i32) -> (i32, i32) {
    %c0_i32 = arith.constant 0 : i32
    %c0_i32_0 = arith.constant 0 : i32
    %c0_i32_1 = arith.constant 0 : i32
    return %c0_i32, %c0_i32_0 : i32, i32
  }
  func.func @transform_11(%arg0: i32) -> (i32, i32) {
    %c0_i32 = arith.constant 0 : i32
    %c0_i32_0 = arith.constant 0 : i32
    %c0_i32_1 = arith.constant 0 : i32
    return %c0_i32, %c0_i32_0 : i32, i32
  }
  func.func @transform_12(%arg0: i32) -> (i32, i32) {
    %c0_i32 = arith.constant 0 : i32
    %c0_i32_0 = arith.constant 0 : i32
    %c0_i32_1 = arith.constant 0 : i32
    return %c0_i32, %c0_i32_0 : i32, i32
  }
  func.func @transform_13(%arg0: i32) -> (i32, i32) {
    %c0_i32 = arith.constant 0 : i32
    %c0_i32_0 = arith.constant 0 : i32
    return %c0_i32, %arg0 : i32, i32
  }
}

</mosaic_0001>

<llo_original>
// kernel: concrete_dropout_nn_forward.3
$region0: #{concrete_dropout_nn_forward.3}
  #allocation0 [shape = 'u32[]', space=smem, size = 0x4, offset = 0x4, fixed_abs, tag = 'smem constant byte address 0x4 - core index']
  #allocation1 [shape = 'u32[144,128]{1,0:T(1,128)}', space=vmem, size = 0x12000, scoped, tag = 'internal scratch']
  #allocation2 [shape = 'f32[1,1]{1,0:T(1,128)S(1)}', space=vmem, size = 0x200, scoped, tag = 'scoped memory for concrete_dropout_nn_forward.3']
  %s0 = inlined_call_operand.vmem [shape: f32[3], index: 0, kind: input, shape index: {}]
  %s1 = inlined_call_operand.vmem [shape: f32[2,128], index: 1, kind: input, shape index: {}]
  %s2 = inlined_call_operand.vmem [shape: f32[2,128], index: 2, kind: input, shape index: {}]
  %s3 = inlined_call_operand.vmem [shape: f32[32,128], index: 3, kind: input, shape index: {}]
  %s4 = inlined_call_operand.vmem [shape: f32[16,128], index: 4, kind: input, shape index: {}]
  %s5 = inlined_call_operand.vmem [shape: f32[32,2], index: 5, kind: input, shape index: {}]
  %s6 = inlined_call_operand.vmem [shape: f32[32,1], index: 6, kind: input, shape index: {}]
  %s7 = inlined_call_operand.vmem [shape: f32[16,32], index: 7, kind: input, shape index: {}]
  %s8 = inlined_call_operand.vmem [shape: f32[16,1], index: 8, kind: input, shape index: {}]
  %s9 = inlined_call_operand.vmem [shape: f32[8,16], index: 9, kind: input, shape index: {}]
  %s10 = inlined_call_operand.vmem [shape: f32[8,1], index: 10, kind: input, shape index: {}]
  %s11 = inlined_call_operand.vmem [shape: f32[1,8], index: 11, kind: input, shape index: {}]
  %s12 = inlined_call_operand.<no memory space> [shape: f32[1,1], index: 12, kind: input, shape index: {}]
  %s13 = inlined_call_operand.vmem [shape: f32[1,128], index: 13, kind: output, shape index: {}]
  %s14 = sld [smem:[#allocation0]]
  $region66: #{concrete_dropout_nn_forward.3} parent=0
    _
  %s16 = ssub.s32 1, %s14
  %s17 = scalar_select 0, %s16, %s14
  %v18 = vstv %s12
  %19 = vst [vmem:[#allocation2] sm:$0x1] %v18
  $region1: #{concrete_dropout_nn_forward.3} parent=0
    #allocation3 [shape = 'u8[512]{0}', space=smem, size = 0x200, scoped, tag = 'input window, operand 0, single buffered']
    #allocation4 [shape = 's32[1]{0}', space=sflag, size = 0x4, scoped, tag = 'scoped memory for concrete_dropout_nn_forward.3']
    %20 = vsyncpa [#allocation4], 0
    // Predicated region
    $region2: #{concrete_dropout_nn_forward.3} parent=1 // pred_check
      _
    $region3: #{concrete_dropout_nn_forward.3} parent=1 // pred_check_branch
      %22 = sbr.rel (0) target = $region5
    $region4: #{concrete_dropout_nn_forward.3} parent=1 // pred_region
      %s24 = ssub.s32 16, 16
      %25 = vsyncadd [#allocation4], %s24
      %s27 = sshll.u32 %s0, 4
      %s28 = int_to_ptr.vmem [resolvable:$true] %s27
      %30 = dma.vmem_to_smem %s28, 16, [#allocation3], [#allocation4]
    $region5: #{concrete_dropout_nn_forward.3} parent=1 // pred_fallthru
      _
    // Predicated region
    $region6: #{concrete_dropout_nn_forward.3} parent=1 // pred_check
      _
    $region7: #{concrete_dropout_nn_forward.3} parent=1 // pred_check_branch
      %32 = sbr.rel (0) target = $region9
    $region8: #{concrete_dropout_nn_forward.3} parent=1 // pred_region
      _
    $region9: #{concrete_dropout_nn_forward.3} parent=1 // pred_fallthru
      _
    // Predicated region
    $region10: #{concrete_dropout_nn_forward.3} parent=1 // pred_check
      _
    $region11: #{concrete_dropout_nn_forward.3} parent=1 // pred_check_branch
      %34 = sbr.rel (0) target = $region13
    $region12: #{concrete_dropout_nn_forward.3} parent=1 // pred_region
      _
    $region13: #{concrete_dropout_nn_forward.3} parent=1 // pred_fallthru
      _
    // Predicated region
    $region14: #{concrete_dropout_nn_forward.3} parent=1 // pred_check
      _
    $region15: #{concrete_dropout_nn_forward.3} parent=1 // pred_check_branch
      %36 = sbr.rel (0) target = $region17
    $region16: #{concrete_dropout_nn_forward.3} parent=1 // pred_region
      _
    $region17: #{concrete_dropout_nn_forward.3} parent=1 // pred_fallthru
      _
    // Predicated region
    $region18: #{concrete_dropout_nn_forward.3} parent=1 // pred_check
      _
    $region19: #{concrete_dropout_nn_forward.3} parent=1 // pred_check_branch
      %38 = sbr.rel (0) target = $region21
    $region20: #{concrete_dropout_nn_forward.3} parent=1 // pred_region
      _
    $region21: #{concrete_dropout_nn_forward.3} parent=1 // pred_fallthru
      _
    // Predicated region
    $region22: #{concrete_dropout_nn_forward.3} parent=1 // pred_check
      _
    $region23: #{concrete_dropout_nn_forward.3} parent=1 // pred_check_branch
      %40 = sbr.rel (0) target = $region25
    $region24: #{concrete_dropout_nn_forward.3} parent=1 // pred_region
      _
    $region25: #{concrete_dropout_nn_forward.3} parent=1 // pred_fallthru
      _
    // Predicated region
    $region26: #{concrete_dropout_nn_forward.3} parent=1 // pred_check
      _
    $region27: #{concrete_dropout_nn_forward.3} parent=1 // pred_check_branch
      %42 = sbr.rel (0) target = $region29
    $region28: #{concrete_dropout_nn_forward.3} parent=1 // pred_region
      _
    $region29: #{concrete_dropout_nn_forward.3} parent=1 // pred_fallthru
      _
    // Predicated region
    $region30: #{concrete_dropout_nn_forward.3} parent=1 // pred_check
      _
    $region31: #{concrete_dropout_nn_forward.3} parent=1 // pred_check_branch
      %44 = sbr.rel (0) target = $region33
    $region32: #{concrete_dropout_nn_forward.3} parent=1 // pred_region
      _
    $region33: #{concrete_dropout_nn_forward.3} parent=1 // pred_fallthru
      _
    // Predicated region
    $region34: #{concrete_dropout_nn_forward.3} parent=1 // pred_check
      _
    $region35: #{concrete_dropout_nn_forward.3} parent=1 // pred_check_branch
      %46 = sbr.rel (0) target = $region37
    $region36: #{concrete_dropout_nn_forward.3} parent=1 // pred_region
      _
    $region37: #{concrete_dropout_nn_forward.3} parent=1 // pred_fallthru
      _
    // Predicated region
    $region38: #{concrete_dropout_nn_forward.3} parent=1 // pred_check
      _
    $region39: #{concrete_dropout_nn_forward.3} parent=1 // pred_check_branch
      %48 = sbr.rel (0) target = $region41
    $region40: #{concrete_dropout_nn_forward.3} parent=1 // pred_region
      _
    $region41: #{concrete_dropout_nn_forward.3} parent=1 // pred_fallthru
      _
    // Predicated region
    $region42: #{concrete_dropout_nn_forward.3} parent=1 // pred_check
      _
    $region43: #{concrete_dropout_nn_forward.3} parent=1 // pred_check_branch
      %50 = sbr.rel (0) target = $region45
    $region44: #{concrete_dropout_nn_forward.3} parent=1 // pred_region
      _
    $region45: #{concrete_dropout_nn_forward.3} parent=1 // pred_fallthru
      _
    // Predicated region
    $region46: #{concrete_dropout_nn_forward.3} parent=1 // pred_check
      _
    $region47: #{concrete_dropout_nn_forward.3} parent=1 // pred_check_branch
      %52 = sbr.rel (0) target = $region49
    $region48: #{concrete_dropout_nn_forward.3} parent=1 // pred_region
      _
    $region49: #{concrete_dropout_nn_forward.3} parent=1 // pred_fallthru
      _
    // Predicated region
    $region50: #{concrete_dropout_nn_forward.3} parent=1 // pred_check
      _
    $region51: #{concrete_dropout_nn_forward.3} parent=1 // pred_check_branch
      %54 = sbr.rel (0) target = $region53
    $region52: #{concrete_dropout_nn_forward.3} parent=1 // pred_region
      _
    $region53: #{concrete_dropout_nn_forward.3} parent=1 // pred_fallthru
      _
    // Predicated region
    $region54: #{concrete_dropout_nn_forward.3} parent=1 // pred_check
      _
    $region55: #{concrete_dropout_nn_forward.3} parent=1 // pred_check_branch
      %56 = sbr.rel (0) target = $region57
    $region56: #{concrete_dropout_nn_forward.3} parent=1 // pred_region
      %57 = dma.done [#allocation4], 16
    $region57: #{concrete_dropout_nn_forward.3} parent=1 // pred_fallthru
      _
    %58 = sfence
    %v59 = vld [vmem:[%s1] sm:$0x3]
    %s60 = sld [smem:[#allocation3]]
    %v61 = vld [vmem:[%s2] sm:$0x3]
    %v62 = vmax.f32 %v61, 0.001
    %v63 = vmin.f32 %v62, 0.999
    %v64 = vadd.f32 %v63, 1e-07
    %v65 = vsub.f32 1.0, %v63
    %v66 = vadd.f32 %v65, 1e-07
    %v67 = vmul.f32 %v64, %v64
    %v68 = vmul.f32 %v67, %v67
    %v69 = vmul.f32 %v68, %v68
    %v70 = vmul.f32 %v69, %v67
    %v71 = vmul.f32 %v66, %v66
    %v72 = vmul.f32 %v71, %v71
    %v73 = vmul.f32 %v72, %v72
    %v74 = vmul.f32 %v73, %v71
    %v75 = vstv %s60
    %v76 = vmul.f32 %v75, %v70
    %v77 = vadd.f32 %v74, %v76
    %v78 = vrcp.pop %v77
    %v79 = vmul.f32 %v74, %v78
    %v80 = vmul.f32 %v59, %v79
    %v81 = vld [vmem:[%s5] sm:$0xff]
    %v82 = vld [vmem:[%s5 + $0x8] sm:$0xff]
    %v83 = vld [vmem:[%s5 + $0x10] sm:$0xff]
    %v84 = vld [vmem:[%s5 + $0x18] sm:$0xff]
    %v85 = vld [vmem:[%s6] sm:$0xff]
    %v86 = vld [vmem:[%s6 + $0x8] sm:$0xff]
    %v87 = vld [vmem:[%s6 + $0x10] sm:$0xff]
    %v88 = vld [vmem:[%s6 + $0x18] sm:$0xff]
    %90 = vset.pattern.permute.xlu0 0
    %91 = vperm.xlu0 %90, %v85
    %v92 = vpop.permute.xlu0 %91
    %95 = vset.pattern.permute.xlu0 0
    %96 = vperm.xlu0 %95, %v86
    %v97 = vpop.permute.xlu0 %96
    %100 = vset.pattern.permute.xlu0 0
    %101 = vperm.xlu0 %100, %v87
    %v102 = vpop.permute.xlu0 %101
    %105 = vset.pattern.permute.xlu0 0
    %106 = vperm.xlu0 %105, %v88
    %v107 = vpop.permute.xlu0 %106
    %vm109 = vcmask 15360
    %v111 = vsel %vm109, %v81, 0
    %v114 = vsel %vm109, %v82, 0
    %v117 = vsel %vm109, %v83, 0
    %v120 = vsel %vm109, %v84, 0
    %vm122 = vcmask 1041408
    %v124 = vsel %vm122, %v80, 0
    %126 = vmatprep.subr.mxu0 0.0
    %127 = vmatpush1.msra.mxu0 %v124
    %128 = vmatprep.subr.mxu0 0.0
    %129 = vmatpush1.msra.mxu0 0.0
    %130 = vmatprep.subr.mxu0 0.0
    %131 = vmatpush1.msra.mxu0 0.0
    %132 = vmatprep.subr.mxu0 0.0
    %133 = vmatpush1.msra.mxu0 0.0
    %134 = vmatprep.subr.mxu0 0.0
    %135 = vmatpush1.msra.mxu0 0.0
    %136 = vmatprep.subr.mxu0 0.0
    %137 = vmatpush1.msra.mxu0 0.0
    %138 = vmatprep.subr.mxu0 0.0
    %139 = vmatpush1.msra.mxu0 0.0
    %140 = vmatprep.subr.mxu0 0.0
    %141 = vmatpush1.msra.mxu0 0.0
    %142 = vmatprep.subr.mxu0 0.0
    %143 = vmatpush1.msra.mxu0 0.0
    %144 = vmatprep.subr.mxu0 0.0
    %145 = vmatpush1.msra.mxu0 0.0
    %146 = vmatprep.subr.mxu0 0.0
    %147 = vmatpush1.msra.mxu0 0.0
    %148 = vmatprep.subr.mxu0 0.0
    %149 = vmatpush1.msra.mxu0 0.0
    %150 = vmatprep.subr.mxu0 0.0
    %151 = vmatpush1.msra.mxu0 0.0
    %152 = vmatprep.subr.mxu0 0.0
    %153 = vmatpush1.msra.mxu0 0.0
    %154 = vmatprep.subr.mxu0 0.0
    %155 = vmatpush1.msra.mxu0 0.0
    %156 = vmatprep.subr.mxu0 0.0
    %157 = vmatpush1.msra.mxu0 0.0
    %158 = vmatprep.subr.mxu0 0.0
    %159 = vmatpush1.msra.mxu0 0.0
    %160 = vmatprep.subr.mxu0 0.0
    %161 = vmatpush1.msra.mxu0 0.0
    %162 = vmatprep.subr.mxu0 0.0
    %163 = vmatpush1.msra.mxu0 0.0
    %164 = vmatprep.subr.mxu0 0.0
    %165 = vmatpush1.msra.mxu0 0.0
    %166 = vmatprep.subr.mxu0 0.0
    %167 = vmatpush1.msra.mxu0 0.0
    %168 = vmatprep.subr.mxu0 0.0
    %169 = vmatpush1.msra.mxu0 0.0
    %170 = vmatprep.subr.mxu0 0.0
    %171 = vmatpush1.msra.mxu0 0.0
    %172 = vmatprep.subr.mxu0 0.0
    %173 = vmatpush1.msra.mxu0 0.0
    %174 = vmatprep.subr.mxu0 0.0
    %175 = vmatpush1.msra.mxu0 0.0
    %176 = vmatprep.subr.mxu0 0.0
    %177 = vmatpush1.msra.mxu0 0.0
    %178 = vmatprep.subr.mxu0 0.0
    %179 = vmatpush1.msra.mxu0 0.0
    %180 = vmatprep.subr.mxu0 0.0
    %181 = vmatpush1.msra.mxu0 0.0
    %182 = vmatprep.subr.mxu0 0.0
    %183 = vmatpush1.msra.mxu0 0.0
    %184 = vmatprep.subr.mxu0 0.0
    %185 = vmatpush1.msra.mxu0 0.0
    %186 = vmatprep.subr.mxu0 0.0
    %187 = vmatpush1.msra.mxu0 0.0
    %188 = vmatprep.subr.mxu0 0.0
    %189 = vmatpush1.msra.mxu0 0.0
    %190 = vmatprep.mubr.f32.mxu0 0.0
    %191 = vmatmul.mubr.f32.gmra.mrb[0].mxu0 %v111
    %v192 = vpop.f32.mrb[0].mxu0
    %v193 = vadd.f32 %v92, %v192
    %v194 = vpop.f32.mrb[0].mxu0
    %195 = vmatprep.mubr.f32.mxu0 0.0
    %196 = vmatmul.mubr.f32.gmra.mrb[0].mxu0 %v114
    %v197 = vpop.f32.mrb[0].mxu0
    %v198 = vadd.f32 %v97, %v197
    %v199 = vpop.f32.mrb[0].mxu0
    %200 = vmatprep.mubr.f32.mxu0 0.0
    %201 = vmatmul.mubr.f32.gmra.mrb[0].mxu0 %v117
    %v202 = vpop.f32.mrb[0].mxu0
    %v203 = vadd.f32 %v102, %v202
    %v204 = vpop.f32.mrb[0].mxu0
    %205 = vmatprep.mubr.f32.mxu0 0.0
    %206 = vmatmul.mubr.f32.gmra.mrb[0].mxu0 %v120
    %v207 = vpop.f32.mrb[0].mxu0
    %v208 = vadd.f32 %v107, %v207
    %v209 = vpop.f32.mrb[0].mxu0
    %210 = vdwg.mxu0
    %v211 = vmax.f32 %v193, 0.0
    %v212 = vmax.f32 %v198, 0.0
    %v213 = vmax.f32 %v203, 0.0
    %v214 = vmax.f32 %v208, 0.0
    %s215 = sld [smem:[#allocation3 + $0x1]]
    %v216 = vld [vmem:[%s3] sm:$0xff]
    %v217 = vld [vmem:[%s3 + $0x8] sm:$0xff]
    %v218 = vld [vmem:[%s3 + $0x10] sm:$0xff]
    %v219 = vld [vmem:[%s3 + $0x18] sm:$0xff]
    %v220 = vmax.f32 %v216, 0.001
    %v221 = vmax.f32 %v217, 0.001
    %v222 = vmax.f32 %v218, 0.001
    %v223 = vmax.f32 %v219, 0.001
    %v224 = vmin.f32 %v220, 0.999
    %v225 = vmin.f32 %v221, 0.999
    %v226 = vmin.f32 %v222, 0.999
    %v227 = vmin.f32 %v223, 0.999
    %v228 = vadd.f32 %v224, 1e-07
    %v229 = vadd.f32 %v225, 1e-07
    %v230 = vadd.f32 %v226, 1e-07
    %v231 = vadd.f32 %v227, 1e-07
    %v232 = vsub.f32 1.0, %v224
    %v233 = vsub.f32 1.0, %v225
    %v234 = vsub.f32 1.0, %v226
    %v235 = vsub.f32 1.0, %v227
    %v236 = vadd.f32 %v232, 1e-07
    %v237 = vadd.f32 %v233, 1e-07
    %v238 = vadd.f32 %v234, 1e-07
    %v239 = vadd.f32 %v235, 1e-07
    %v240 = vmul.f32 %v228, %v228
    %v241 = vmul.f32 %v229, %v229
    %v242 = vmul.f32 %v230, %v230
    %v243 = vmul.f32 %v231, %v231
    %v244 = vmul.f32 %v240, %v240
    %v245 = vmul.f32 %v241, %v241
    %v246 = vmul.f32 %v242, %v242
    %v247 = vmul.f32 %v243, %v243
    %v248 = vmul.f32 %v244, %v244
    %v249 = vmul.f32 %v245, %v245
    %v250 = vmul.f32 %v246, %v246
    %v251 = vmul.f32 %v247, %v247
    %v252 = vmul.f32 %v248, %v240
    %v253 = vmul.f32 %v249, %v241
    %v254 = vmul.f32 %v250, %v242
    %v255 = vmul.f32 %v251, %v243
    %v256 = vmul.f32 %v236, %v236
    %v257 = vmul.f32 %v237, %v237
    %v258 = vmul.f32 %v238, %v238
    %v259 = vmul.f32 %v239, %v239
    %v260 = vmul.f32 %v256, %v256
    %v261 = vmul.f32 %v257, %v257
    %v262 = vmul.f32 %v258, %v258
    %v263 = vmul.f32 %v259, %v259
    %v264 = vmul.f32 %v260, %v260
    %v265 = vmul.f32 %v261, %v261
    %v266 = vmul.f32 %v262, %v262
    %v267 = vmul.f32 %v263, %v263
    %v268 = vmul.f32 %v264, %v256
    %v269 = vmul.f32 %v265, %v257
    %v270 = vmul.f32 %v266, %v258
    %v271 = vmul.f32 %v267, %v259
    %v272 = vstv %s215
    %v273 = vmul.f32 %v272, %v252
    %v274 = vmul.f32 %v272, %v253
    %v275 = vmul.f32 %v272, %v254
    %v276 = vmul.f32 %v272, %v255
    %v277 = vadd.f32 %v268, %v273
    %v278 = vadd.f32 %v269, %v274
    %v279 = vadd.f32 %v270, %v275
    %v280 = vadd.f32 %v271, %v276
    %v281 = vrcp.pop %v277
    %v282 = vmul.f32 %v268, %v281
    %v283 = vrcp.pop %v278
    %v284 = vmul.f32 %v269, %v283
    %v285 = vrcp.pop %v279
    %v286 = vmul.f32 %v270, %v285
    %v287 = vrcp.pop %v280
    %v288 = vmul.f32 %v271, %v287
    %v289 = vmul.f32 %v211, %v282
    %v290 = vmul.f32 %v212, %v284
    %v291 = vmul.f32 %v213, %v286
    %v292 = vmul.f32 %v214, %v288
    %v293 = vld [vmem:[%s7] sm:$0xff]
    %v294 = vld [vmem:[%s7 + $0x8] sm:$0xff]
    %v295 = vld [vmem:[%s8] sm:$0xff]
    %v296 = vld [vmem:[%s8 + $0x8] sm:$0xff]
    %298 = vset.pattern.permute.xlu0 0
    %299 = vperm.xlu0 %298, %v295
    %v300 = vpop.permute.xlu0 %299
    %303 = vset.pattern.permute.xlu0 0
    %304 = vperm.xlu0 %303, %v296
    %v305 = vpop.permute.xlu0 %304
    %vm307 = vcmask 261120
    %v309 = vsel %vm307, %v293, 0
    %v312 = vsel %vm307, %v294, 0
    %314 = vmatprep.subr.mxu0 0.0
    %315 = vmatpush1.msra.mxu0 %v289
    %316 = vmatprep.subr.mxu0 0.0
    %317 = vmatpush1.msra.mxu0 %v290
    %318 = vmatprep.subr.mxu0 0.0
    %319 = vmatpush1.msra.mxu0 %v291
    %320 = vmatprep.subr.mxu0 0.0
    %321 = vmatpush1.msra.mxu0 %v292
    %322 = vmatprep.subr.mxu0 0.0
    %323 = vmatpush1.msra.mxu0 0.0
    %324 = vmatprep.subr.mxu0 0.0
    %325 = vmatpush1.msra.mxu0 0.0
    %326 = vmatprep.subr.mxu0 0.0
    %327 = vmatpush1.msra.mxu0 0.0
    %328 = vmatprep.subr.mxu0 0.0
    %329 = vmatpush1.msra.mxu0 0.0
    %330 = vmatprep.subr.mxu0 0.0
    %331 = vmatpush1.msra.mxu0 0.0
    %332 = vmatprep.subr.mxu0 0.0
    %333 = vmatpush1.msra.mxu0 0.0
    %334 = vmatprep.subr.mxu0 0.0
    %335 = vmatpush1.msra.mxu0 0.0
    %336 = vmatprep.subr.mxu0 0.0
    %337 = vmatpush1.msra.mxu0 0.0
    %338 = vmatprep.subr.mxu0 0.0
    %339 = vmatpush1.msra.mxu0 0.0
    %340 = vmatprep.subr.mxu0 0.0
    %341 = vmatpush1.msra.mxu0 0.0
    %342 = vmatprep.subr.mxu0 0.0
    %343 = vmatpush1.msra.mxu0 0.0
    %344 = vmatprep.subr.mxu0 0.0
    %345 = vmatpush1.msra.mxu0 0.0
    %346 = vmatprep.subr.mxu0 0.0
    %347 = vmatpush1.msra.mxu0 0.0
    %348 = vmatprep.subr.mxu0 0.0
    %349 = vmatpush1.msra.mxu0 0.0
    %350 = vmatprep.subr.mxu0 0.0
    %351 = vmatpush1.msra.mxu0 0.0
    %352 = vmatprep.subr.mxu0 0.0
    %353 = vmatpush1.msra.mxu0 0.0
    %354 = vmatprep.subr.mxu0 0.0
    %355 = vmatpush1.msra.mxu0 0.0
    %356 = vmatprep.subr.mxu0 0.0
    %357 = vmatpush1.msra.mxu0 0.0
    %358 = vmatprep.subr.mxu0 0.0
    %359 = vmatpush1.msra.mxu0 0.0
    %360 = vmatprep.subr.mxu0 0.0
    %361 = vmatpush1.msra.mxu0 0.0
    %362 = vmatprep.subr.mxu0 0.0
    %363 = vmatpush1.msra.mxu0 0.0
    %364 = vmatprep.subr.mxu0 0.0
    %365 = vmatpush1.msra.mxu0 0.0
    %366 = vmatprep.subr.mxu0 0.0
    %367 = vmatpush1.msra.mxu0 0.0
    %368 = vmatprep.subr.mxu0 0.0
    %369 = vmatpush1.msra.mxu0 0.0
    %370 = vmatprep.subr.mxu0 0.0
    %371 = vmatpush1.msra.mxu0 0.0
    %372 = vmatprep.subr.mxu0 0.0
    %373 = vmatpush1.msra.mxu0 0.0
    %374 = vmatprep.subr.mxu0 0.0
    %375 = vmatpush1.msra.mxu0 0.0
    %376 = vmatprep.subr.mxu0 0.0
    %377 = vmatpush1.msra.mxu0 0.0
    %378 = vmatprep.mubr.f32.mxu0 0.0
    %379 = vmatmul.mubr.f32.gmra.mrb[0].mxu0 %v309
    %v380 = vpop.f32.mrb[0].mxu0
    %v381 = vadd.f32 %v300, %v380
    %v382 = vpop.f32.mrb[0].mxu0
    %383 = vmatprep.mubr.f32.mxu0 0.0
    %384 = vmatmul.mubr.f32.gmra.mrb[0].mxu0 %v312
    %v385 = vpop.f32.mrb[0].mxu0
    %v386 = vadd.f32 %v305, %v385
    %v387 = vpop.f32.mrb[0].mxu0
    %388 = vdwg.mxu0
    %v389 = vmax.f32 %v381, 0.0
    %v390 = vmax.f32 %v386, 0.0
    %s391 = sld [smem:[#allocation3 + $0x2]]
    %v392 = vld [vmem:[%s4] sm:$0xff]
    %v393 = vld [vmem:[%s4 + $0x8] sm:$0xff]
    %v394 = vmax.f32 %v392, 0.001
    %v395 = vmax.f32 %v393, 0.001
    %v396 = vmin.f32 %v394, 0.999
    %v397 = vmin.f32 %v395, 0.999
    %v398 = vadd.f32 %v396, 1e-07
    %v399 = vadd.f32 %v397, 1e-07
    %v400 = vsub.f32 1.0, %v396
    %v401 = vsub.f32 1.0, %v397
    %v402 = vadd.f32 %v400, 1e-07
    %v403 = vadd.f32 %v401, 1e-07
    %v404 = vmul.f32 %v398, %v398
    %v405 = vmul.f32 %v399, %v399
    %v406 = vmul.f32 %v404, %v404
    %v407 = vmul.f32 %v405, %v405
    %v408 = vmul.f32 %v406, %v406
    %v409 = vmul.f32 %v407, %v407
    %v410 = vmul.f32 %v408, %v404
    %v411 = vmul.f32 %v409, %v405
    %v412 = vmul.f32 %v402, %v402
    %v413 = vmul.f32 %v403, %v403
    %v414 = vmul.f32 %v412, %v412
    %v415 = vmul.f32 %v413, %v413
    %v416 = vmul.f32 %v414, %v414
    %v417 = vmul.f32 %v415, %v415
    %v418 = vmul.f32 %v416, %v412
    %v419 = vmul.f32 %v417, %v413
    %v420 = vstv %s391
    %v421 = vmul.f32 %v420, %v410
    %v422 = vmul.f32 %v420, %v411
    %v423 = vadd.f32 %v418, %v421
    %v424 = vadd.f32 %v419, %v422
    %v425 = vrcp.pop %v423
    %v426 = vmul.f32 %v418, %v425
    %v427 = vrcp.pop %v424
    %v428 = vmul.f32 %v419, %v427
    %v429 = vmul.f32 %v389, %v426
    %v430 = vmul.f32 %v390, %v428
    %v431 = vld [vmem:[%s9] sm:$0xff]
    %v432 = vld [vmem:[%s10] sm:$0xff]
    %434 = vset.pattern.permute.xlu0 0
    %435 = vperm.xlu0 %434, %v432
    %v436 = vpop.permute.xlu0 %435
    %vm438 = vcmask 130048
    %v440 = vsel %vm438, %v431, 0
    %442 = vmatprep.subr.mxu0 0.0
    %443 = vmatpush1.msra.mxu0 %v429
    %444 = vmatprep.subr.mxu0 0.0
    %445 = vmatpush1.msra.mxu0 %v430
    %446 = vmatprep.subr.mxu0 0.0
    %447 = vmatpush1.msra.mxu0 0.0
    %448 = vmatprep.subr.mxu0 0.0
    %449 = vmatpush1.msra.mxu0 0.0
    %450 = vmatprep.subr.mxu0 0.0
    %451 = vmatpush1.msra.mxu0 0.0
    %452 = vmatprep.subr.mxu0 0.0
    %453 = vmatpush1.msra.mxu0 0.0
    %454 = vmatprep.subr.mxu0 0.0
    %455 = vmatpush1.msra.mxu0 0.0
    %456 = vmatprep.subr.mxu0 0.0
    %457 = vmatpush1.msra.mxu0 0.0
    %458 = vmatprep.subr.mxu0 0.0
    %459 = vmatpush1.msra.mxu0 0.0
    %460 = vmatprep.subr.mxu0 0.0
    %461 = vmatpush1.msra.mxu0 0.0
    %462 = vmatprep.subr.mxu0 0.0
    %463 = vmatpush1.msra.mxu0 0.0
    %464 = vmatprep.subr.mxu0 0.0
    %465 = vmatpush1.msra.mxu0 0.0
    %466 = vmatprep.subr.mxu0 0.0
    %467 = vmatpush1.msra.mxu0 0.0
    %468 = vmatprep.subr.mxu0 0.0
    %469 = vmatpush1.msra.mxu0 0.0
    %470 = vmatprep.subr.mxu0 0.0
    %471 = vmatpush1.msra.mxu0 0.0
    %472 = vmatprep.subr.mxu0 0.0
    %473 = vmatpush1.msra.mxu0 0.0
    %474 = vmatprep.subr.mxu0 0.0
    %475 = vmatpush1.msra.mxu0 0.0
    %476 = vmatprep.subr.mxu0 0.0
    %477 = vmatpush1.msra.mxu0 0.0
    %478 = vmatprep.subr.mxu0 0.0
    %479 = vmatpush1.msra.mxu0 0.0
    %480 = vmatprep.subr.mxu0 0.0
    %481 = vmatpush1.msra.mxu0 0.0
    %482 = vmatprep.subr.mxu0 0.0
    %483 = vmatpush1.msra.mxu0 0.0
    %484 = vmatprep.subr.mxu0 0.0
    %485 = vmatpush1.msra.mxu0 0.0
    %486 = vmatprep.subr.mxu0 0.0
    %487 = vmatpush1.msra.mxu0 0.0
    %488 = vmatprep.subr.mxu0 0.0
    %489 = vmatpush1.msra.mxu0 0.0
    %490 = vmatprep.subr.mxu0 0.0
    %491 = vmatpush1.msra.mxu0 0.0
    %492 = vmatprep.subr.mxu0 0.0
    %493 = vmatpush1.msra.mxu0 0.0
    %494 = vmatprep.subr.mxu0 0.0
    %495 = vmatpush1.msra.mxu0 0.0
    %496 = vmatprep.subr.mxu0 0.0
    %497 = vmatpush1.msra.mxu0 0.0
    %498 = vmatprep.subr.mxu0 0.0
    %499 = vmatpush1.msra.mxu0 0.0
    %500 = vmatprep.subr.mxu0 0.0
    %501 = vmatpush1.msra.mxu0 0.0
    %502 = vmatprep.subr.mxu0 0.0
    %503 = vmatpush1.msra.mxu0 0.0
    %504 = vmatprep.subr.mxu0 0.0
    %505 = vmatpush1.msra.mxu0 0.0
    %506 = vmatprep.mubr.f32.mxu0 0.0
    %507 = vmatmul.mubr.f32.gmra.mrb[0].mxu0 %v440
    %v508 = vpop.f32.mrb[0].mxu0
    %v509 = vadd.f32 %v436, %v508
    %v510 = vpop.f32.mrb[0].mxu0
    %511 = vdwg.mxu0
    %v512 = vmax.f32 %v509, 0.0
    %v513 = vld [vmem:[%s11] sm:$0x1]
    %v514 = vld [vmem:[#allocation2] sm:$0x1]
    %516 = vset.pattern.permute.xlu0 0
    %517 = vperm.xlu0 %516, %v514
    %v518 = vpop.permute.xlu0 %517
    %v520 = vlaneseq
    %v521 = vshrl.u32 %v520, 7
    %v522 = vsub.s32 0, %v521
    %v523 = vrot.slane %v518, %v522
    %vm524 = vcmask 64512
    %v526 = vsel %vm524, %v513, 0
    %528 = vmatprep.subr.mxu0 0.0
    %529 = vmatpush1.msra.mxu0 %v512
    %530 = vmatprep.subr.mxu0 0.0
    %531 = vmatpush1.msra.mxu0 0.0
    %532 = vmatprep.subr.mxu0 0.0
    %533 = vmatpush1.msra.mxu0 0.0
    %534 = vmatprep.subr.mxu0 0.0
    %535 = vmatpush1.msra.mxu0 0.0
    %536 = vmatprep.subr.mxu0 0.0
    %537 = vmatpush1.msra.mxu0 0.0
    %538 = vmatprep.subr.mxu0 0.0
    %539 = vmatpush1.msra.mxu0 0.0
    %540 = vmatprep.subr.mxu0 0.0
    %541 = vmatpush1.msra.mxu0 0.0
    %542 = vmatprep.subr.mxu0 0.0
    %543 = vmatpush1.msra.mxu0 0.0
    %544 = vmatprep.subr.mxu0 0.0
    %545 = vmatpush1.msra.mxu0 0.0
    %546 = vmatprep.subr.mxu0 0.0
    %547 = vmatpush1.msra.mxu0 0.0
    %548 = vmatprep.subr.mxu0 0.0
    %549 = vmatpush1.msra.mxu0 0.0
    %550 = vmatprep.subr.mxu0 0.0
    %551 = vmatpush1.msra.mxu0 0.0
    %552 = vmatprep.subr.mxu0 0.0
    %553 = vmatpush1.msra.mxu0 0.0
    %554 = vmatprep.subr.mxu0 0.0
    %555 = vmatpush1.msra.mxu0 0.0
    %556 = vmatprep.subr.mxu0 0.0
    %557 = vmatpush1.msra.mxu0 0.0
    %558 = vmatprep.subr.mxu0 0.0
    %559 = vmatpush1.msra.mxu0 0.0
    %560 = vmatprep.subr.mxu0 0.0
    %561 = vmatpush1.msra.mxu0 0.0
    %562 = vmatprep.subr.mxu0 0.0
    %563 = vmatpush1.msra.mxu0 0.0
    %564 = vmatprep.subr.mxu0 0.0
    %565 = vmatpush1.msra.mxu0 0.0
    %566 = vmatprep.subr.mxu0 0.0
    %567 = vmatpush1.msra.mxu0 0.0
    %568 = vmatprep.subr.mxu0 0.0
    %569 = vmatpush1.msra.mxu0 0.0
    %570 = vmatprep.subr.mxu0 0.0
    %571 = vmatpush1.msra.mxu0 0.0
    %572 = vmatprep.subr.mxu0 0.0
    %573 = vmatpush1.msra.mxu0 0.0
    %574 = vmatprep.subr.mxu0 0.0
    %575 = vmatpush1.msra.mxu0 0.0
    %576 = vmatprep.subr.mxu0 0.0
    %577 = vmatpush1.msra.mxu0 0.0
    %578 = vmatprep.subr.mxu0 0.0
    %579 = vmatpush1.msra.mxu0 0.0
    %580 = vmatprep.subr.mxu0 0.0
    %581 = vmatpush1.msra.mxu0 0.0
    %582 = vmatprep.subr.mxu0 0.0
    %583 = vmatpush1.msra.mxu0 0.0
    %584 = vmatprep.subr.mxu0 0.0
    %585 = vmatpush1.msra.mxu0 0.0
    %586 = vmatprep.subr.mxu0 0.0
    %587 = vmatpush1.msra.mxu0 0.0
    %588 = vmatprep.subr.mxu0 0.0
    %589 = vmatpush1.msra.mxu0 0.0
    %590 = vmatprep.subr.mxu0 0.0
    %591 = vmatpush1.msra.mxu0 0.0
    %592 = vmatprep.mubr.f32.mxu0 0.0
    %593 = vmatmul.mubr.f32.gmra.mrb[0].mxu0 %v526
    %v594 = vpop.f32.mrb[0].mxu0
    %v595 = vadd.f32 %v523, %v594
    %v596 = vpop.f32.mrb[0].mxu0
    %597 = vdwg.mxu0
    %v598 = vxor.u32 %v595, 2147483648
    %v599 = vmul.f32 %v598, 1.442695
    %v600 = vpow.pop %v599
    %v601 = vadd.f32 %v600, 1.0
    %v602 = vrcp.pop %v601
    %v603 = vmul.f32 1.0, %v602
    %604 = vst [vmem:[%s13] sm:$0x1] %v603
    // Predicated region
    $region58: #{concrete_dropout_nn_forward.3} parent=1 // pred_check
      _
    $region59: #{concrete_dropout_nn_forward.3} parent=1 // pred_check_branch
      %606 = sbr.rel (0) target = $region61
    $region60: #{concrete_dropout_nn_forward.3} parent=1 // pred_region
      _
    $region61: #{concrete_dropout_nn_forward.3} parent=1 // pred_fallthru
      _
    // Predicated region
    $region62: #{concrete_dropout_nn_forward.3} parent=1 // pred_check
      _
    $region63: #{concrete_dropout_nn_forward.3} parent=1 // pred_check_branch
      %608 = sbr.rel (0) target = $region65
    $region64: #{concrete_dropout_nn_forward.3} parent=1 // pred_region
      _
    $region65: #{concrete_dropout_nn_forward.3} parent=1 // pred_fallthru
      _
    %609 = vsyncpa [#allocation4], 1

</llo_original>
